<compile_context>
chip_gen: v7x
topology: tpu7x:2x2x1
jax: 0.10.0
libtpu: 0.0.40
codegen_flags: <defaults>
</compile_context>

<pallas_src>
import jax
import jax.numpy as jnp
from jax.experimental import pallas as pl
from jax.experimental.pallas import tpu as pltpu


def _identity_kernel(x_ref, o_ref):
    # Elementwise identity: pure VMEM tile copy (the whole "forward pass").
    o_ref[...] = x_ref[...]


_WIDTH_CANDIDATES = (4096, 2048, 1024, 512, 256, 128)


def _target_tile_bytes() -> int:
    """Per-block byte target, chosen per TPU generation (trace-time Python)."""
    try:
        kind = jax.devices()[0].device_kind.lower()
    except Exception:
        return 2 * 1024 * 1024
    if "v5" in kind:
        # v5e scoped-VMEM default is 16 MiB: 4 live buffers x 2 MiB = 8 MiB.
        return 2 * 1024 * 1024
    # v6e / v7x: 32 MiB scoped default; 4 live buffers x 4 MiB = 16 MiB.
    return 4 * 1024 * 1024


@jax.jit
def _identity_pallas_copy(x: jax.Array) -> jax.Array:
    """Streaming HBM->HBM copy of x via Pallas (opt-in kernel path)."""
    orig_shape = x.shape
    dtype = x.dtype
    total = x.size
    if total == 0:
        return x

    itemsize = jnp.dtype(dtype).itemsize

    # Widest lane-dense width (multiple of 128) that divides the flat size.
    width = None
    for w in _WIDTH_CANDIDATES:
        if total % w == 0:
            width = w
            break
    if width is None:
        # Ragged (<128-aligned) tail: pad/slice would cost two extra full HBM
        # passes, so just honor Identity semantics directly.
        # TODO(synk): handle the ragged tail with a tiny second pallas_call if
        # the Pallas path must cover non-128-divisible sizes.
        return x

    rows = total // width
    x2d = x.reshape(rows, width)

    # Sublane multiple for this dtype (f32: 8, bf16: 16, int8/fp8: 32).
    sub = max(8, 32 // itemsize)
    target_rows = max(1, _target_tile_bytes() // (width * itemsize))

    if rows <= target_rows:
        tile_rows = rows  # single full-extent block (always layout-legal)
    else:
        # Prefer a divisor of rows (multiple of sub) near the byte target so
        # every block is full-size (no masked epilogue).
        tile_rows = None
        for r in range(min(target_rows, rows), 0, -1):
            if rows % r == 0 and r % sub == 0:
                tile_rows = r
                break
        if tile_rows is None:
            tile_rows = max(sub, (target_rows // sub) * sub)

    grid = (pl.cdiv(rows, tile_rows),)

    out2d = pl.pallas_call(
        _identity_kernel,
        out_shape=jax.ShapeDtypeStruct((rows, width), dtype),
        grid=grid,
        in_specs=[pl.BlockSpec((tile_rows, width), lambda i: (i, 0))],
        out_specs=pl.BlockSpec((tile_rows, width), lambda i: (i, 0)),
        cost_estimate=pl.CostEstimate(
            flops=0,
            transcendentals=0,
            bytes_accessed=2 * total * itemsize,
        ),
        compiler_params=pltpu.CompilerParams(
            dimension_semantics=("parallel",),
        ),
    )(x2d)

    return out2d.reshape(orig_shape)


def identity_forward(x: jax.Array, *, use_pallas_copy: bool = False) -> jax.Array:
    """nn.Identity forward: returns x unchanged (same shape, same dtype).

    The honest optimum for Identity is `return x` (zero data movement), which
    is the default. Pass use_pallas_copy=True to run the HBM-roofline Pallas
    copy kernel instead (useful only to exercise the kernel path).
    """
    if not use_pallas_copy:
        return x
    return _identity_pallas_copy(x)


if __name__ == "__main__":
    key = jax.random.PRNGKey(0)
    # Small NCHW input consistent with a conv-style model: batch=2, ch=4, 16x16.
    x = jax.random.normal(key, (2, 4, 16, 16), dtype=jnp.float32)

    # Default path: true identity, zero data movement.
    y_fast = identity_forward(x)
    jax.block_until_ready(y_fast)
    assert y_fast.shape == x.shape
    assert y_fast.dtype == x.dtype
    assert bool(jnp.all(y_fast == x))

    # Opt-in Pallas path: exercises the streaming-copy kernel.
    y_pallas = identity_forward(x, use_pallas_copy=True)
    jax.block_until_ready(y_pallas)
    assert y_pallas.shape == x.shape
    assert y_pallas.dtype == x.dtype
    assert bool(jnp.all(y_pallas == x))

    print("KERNEL_OK")
</pallas_src>

<mosaic_0001>
module attributes {stable_mosaic.version = 11 : i64} {
  func.func @_identity_kernel(%arg0: i32, %arg1: memref<1x2048xf32, #tpu.memory_space<vmem>>, %arg2: memref<1x2048xf32, #tpu.memory_space<vmem>>) attributes {dimension_semantics = [#tpu.dimension_semantics<parallel>], iteration_bounds = array<i64: 1>, scalar_prefetch = 0 : i64, scratch_operands = 0 : i64, tpu.core_type = #tpu.core_type<tc>, window_params = [{transform_indices = @transform_0, window_bounds = array<i64: 1, 2048>}, {transform_indices = @transform_1, window_bounds = array<i64: 1, 2048>}]} {
    %c0 = arith.constant 0 : index
    %c0_0 = arith.constant 0 : index
    %0 = vector.load %arg1[%c0, %c0_0] : memref<1x2048xf32, #tpu.memory_space<vmem>>, vector<1x2048xf32>
    %c0_1 = arith.constant 0 : index
    %c0_2 = arith.constant 0 : index
    %1 = vector.load %arg2[%c0_1, %c0_2] : memref<1x2048xf32, #tpu.memory_space<vmem>>, vector<1x2048xf32>
    tpu.vector_store %arg2[%c0_1, %c0_2], %0 {strides = array<i32>} : memref<1x2048xf32, #tpu.memory_space<vmem>>, vector<1x2048xf32>,
    return
  }
  func.func @transform_0(%arg0: i32) -> (i32, i32) {
    %c0_i32 = arith.constant 0 : i32
    %c0_i32_0 = arith.constant 0 : i32
    return %arg0, %c0_i32 : i32, i32
  }
  func.func @transform_1(%arg0: i32) -> (i32, i32) {
    %c0_i32 = arith.constant 0 : i32
    %c0_i32_0 = arith.constant 0 : i32
    return %arg0, %c0_i32 : i32, i32
  }
}

</mosaic_0001>

<llo_original>
// kernel: _identity_pallas_copy.1
$region0: #{_identity_pallas_copy.1}
  #allocation0 [shape = 'u32[]', space=smem, size = 0x4, offset = 0x4, fixed_abs, tag = 'smem constant byte address 0x4 - core index']
  #allocation1 [shape = 'u32[144,128]{1,0:T(1,128)}', space=vmem, size = 0x12000, scoped, tag = 'internal scratch']
  %s0 = inlined_call_operand.vmem [shape: f32[1,2048], index: 0, kind: input, shape index: {}]
  %s1 = inlined_call_operand.vmem [shape: f32[1,2048], index: 1, kind: output, shape index: {}]
  %s2 = sld [smem:[#allocation0]]
  $region14: #{_identity_pallas_copy.1} parent=0
    _
  %s4 = ssub.s32 1, %s2
  %s5 = scalar_select 0, %s4, %s2
  // Predicated region
  $region2: #{_identity_pallas_copy.1} parent=0 // pred_check
    _
  $region3: #{_identity_pallas_copy.1} parent=0 // pred_check_branch
    %7 = sbr.rel (0) target = $region5
  $region4: #{_identity_pallas_copy.1} parent=0 // pred_region
    _
  $region5: #{_identity_pallas_copy.1} parent=0 // pred_fallthru
    _
  %v8 = vld [vmem:[%s0] sm:$0xff]
  %v9 = vld [vmem:[%s0 + $0x8] sm:$0xff]
  %10 = vst [vmem:[%s1] sm:$0xff] %v8
  %11 = vst [vmem:[%s1 + $0x8] sm:$0xff] %v9
  // Predicated region
  $region6: #{_identity_pallas_copy.1} parent=0 // pred_check
    _
  $region7: #{_identity_pallas_copy.1} parent=0 // pred_check_branch
    %13 = sbr.rel (0) target = $region9
  $region8: #{_identity_pallas_copy.1} parent=0 // pred_region
    _
  $region9: #{_identity_pallas_copy.1} parent=0 // pred_fallthru
    _
  // Predicated region
  $region10: #{_identity_pallas_copy.1} parent=0 // pred_check
    _
  $region11: #{_identity_pallas_copy.1} parent=0 // pred_check_branch
    %15 = sbr.rel (0) target = $region13
  $region12: #{_identity_pallas_copy.1} parent=0 // pred_region
    _
  $region13: #{_identity_pallas_copy.1} parent=0 // pred_fallthru
    _

</llo_original>
